<compile_context>
chip_gen: v5e
topology: v5e:2x2
jax: 0.10.0
libtpu: 0.0.40
codegen_flags: <defaults>
</compile_context>

<pallas_src>
import functools
import math
import random

import jax
import jax.numpy as jnp
import numpy as np
from jax.experimental import pallas as pl
from jax.experimental.pallas import tpu as pltpu


# ---------------------------------------------------------------------------
# Host side: crop-parameter sampling (faithful port of get_params)
# ---------------------------------------------------------------------------
def get_params(img_shape, scale, ratio, rng):
    """Port of RandomResizedCrop.get_params.  NOTE: the module reads
    `width, height = img.shape[1:]` on a CHW tensor, i.e. width <- H and
    height <- W; that quirk is preserved (the crop box may run past the true
    W axis, which torchvision F.crop handles by zero padding)."""
    width, height = img_shape[1], img_shape[2]
    area = height * width
    log_ratio = (math.log(ratio[0]), math.log(ratio[1]))
    for _ in range(10):
        target_area = area * rng.uniform(scale[0], scale[1])
        aspect_ratio = math.exp(rng.uniform(log_ratio[0], log_ratio[1]))
        w = int(round(math.sqrt(target_area * aspect_ratio)))
        h = int(round(math.sqrt(target_area / aspect_ratio)))
        if 0 < w <= width and 0 < h <= height:
            i = rng.randint(0, height - h)   # == torch.randint(0, height-h+1)
            j = rng.randint(0, width - w)
            return i, j, h, w
    in_ratio = float(width) / float(height)
    if in_ratio < min(ratio):
        w = width
        h = int(round(w / min(ratio)))
    elif in_ratio > max(ratio):
        h = height
        w = int(round(h * max(ratio)))
    else:
        w = width
        h = height
    i = (height - h) // 2
    j = (width - w) // 2
    return i, j, h, w


# ---------------------------------------------------------------------------
# Host side: fused crop(+zero-pad)+bilinear-resize interpolation matrix
# ---------------------------------------------------------------------------
def _crop_resize_matrix(out_size, crop_size, crop_offset, full_size):
    """(out_size, full_size) f32 matrix that selects the crop window
    [crop_offset, crop_offset + crop_size) of the full axis (zero weight for
    source indices outside the image == torchvision's zero pad) and
    bilinear-resizes it to out_size (align_corners=False, no antialias)."""
    out = np.arange(out_size, dtype=np.float64)
    s = crop_size / out_size
    src = np.clip((out + 0.5) * s - 0.5, 0.0, max(crop_size - 1, 0))
    i0 = np.floor(src).astype(np.int64)
    i1 = np.minimum(i0 + 1, max(crop_size - 1, 0))
    w1 = src - i0
    w0 = 1.0 - w1
    m = np.zeros((out_size, full_size), dtype=np.float32)
    rows = np.arange(out_size, dtype=np.int64)
    for idx, wgt in ((i0, w0), (i1, w1)):
        a = idx + crop_offset
        ok = (a >= 0) & (a < full_size)
        np.add.at(m, (rows[ok], a[ok]), wgt[ok])
    return m


# ---------------------------------------------------------------------------
# Pallas kernel: out[c] = P_h @ x[c] @ P_w^T   (bf16 MXU, f32 accumulation)
# ---------------------------------------------------------------------------
def _crop_resize_kernel(ph_ref, pwt_ref, x_ref, o_ref, *, rows_first):
    # ph_ref : (OH, H) bf16        pwt_ref: (W, OW) bf16 (pre-transposed on host)
    # x_ref  : (Cb, H, W) input dtype       o_ref : (Cb, OH, OW)
    ph = ph_ref[...]
    pwt = pwt_ref[...]
    for c in range(x_ref.shape[0]):            # unrolled over the channel block
        xc = x_ref[c].astype(jnp.bfloat16)     # cast after the VMEM load
        if rows_first:   # contract H first -> intermediate (OH, W)
            t = jnp.dot(ph, xc, preferred_element_type=jnp.float32)
            oc = jnp.dot(t.astype(jnp.bfloat16), pwt,
                         preferred_element_type=jnp.float32)
        else:            # contract W first -> intermediate (H, OW)
            t = jnp.dot(xc, pwt, preferred_element_type=jnp.float32)
            oc = jnp.dot(ph, t.astype(jnp.bfloat16),
                         preferred_element_type=jnp.float32)
        o_ref[c] = oc.astype(o_ref.dtype)


def resized_crop(img, i, j, h, w, size):
    """Pallas equivalent of torchvision resized_crop(img, i, j, h, w, size,
    bilinear) for a CHW tensor."""
    C, H, W = img.shape
    if isinstance(size, (tuple, list)):
        out_h, out_w = int(size[0]), int(size[1])
    else:
        # TODO(synk): a bare int given to torchvision F.resize resizes only the
        # shorter edge; the module is used for square outputs, so (size, size).
        out_h = out_w = int(size)

    out_dtype = img.dtype if jnp.issubdtype(img.dtype, jnp.floating) else jnp.float32

    # Fused crop+pad+resize matrices, bf16 operands for the MXU (P_w pre-transposed).
    p_h = jnp.asarray(_crop_resize_matrix(out_h, h, i, H), dtype=jnp.bfloat16)
    p_wt = jnp.asarray(_crop_resize_matrix(out_w, w, j, W).T, dtype=jnp.bfloat16)

    # Matmul order: minimise FLOPs / intermediate size (static per image).
    rows_first = out_h * W * (H + out_w) <= out_w * H * (W + out_h)

    # Channels per grid step (amortise ~0.35us/step for many-channel stacks).
    cb = next(d for d in (8, 4, 2, 1) if C % d == 0)

    # Raise the scoped-VMEM limit only when the full-image blocks need it.
    block_bytes = 2 * (cb * H * W * img.dtype.itemsize
                       + cb * out_h * out_w * 4
                       + (out_h * H + W * out_w) * 2)
    vmem_limit = None
    if block_bytes > 24 * 2 ** 20:
        vmem_limit = int(min(2 * block_bytes + (8 << 20), 64 * 2 ** 20))
    # TODO(synk): for images whose full-channel block exceeds even that limit
    # (multi-megapixel on v5e/v7x), add an H-tiled reduction grid axis with an
    # (out_h, out_w) f32 accumulator instead of full-image blocks.

    kernel = functools.partial(_crop_resize_kernel, rows_first=rows_first)
    return pl.pallas_call(
        kernel,
        out_shape=jax.ShapeDtypeStruct((C, out_h, out_w), out_dtype),
        grid=(C // cb,),
        in_specs=[
            pl.BlockSpec((out_h, H), lambda c: (0, 0)),     # P_h   (grid-invariant)
            pl.BlockSpec((W, out_w), lambda c: (0, 0)),     # P_w^T (grid-invariant)
            pl.BlockSpec((cb, H, W), lambda c: (c, 0, 0)),  # x channel block
        ],
        out_specs=pl.BlockSpec((cb, out_h, out_w), lambda c: (c, 0, 0)),
        compiler_params=pltpu.CompilerParams(
            dimension_semantics=("parallel",),
            vmem_limit_bytes=vmem_limit,
        ),
    )(p_h, p_wt, img)


def random_resized_crop(img, size, scale=(0.8, 1.0), ratio=(3.0 / 4.0, 4.0 / 3.0),
                        rng=None):
    """RandomResizedCrop.forward: sample the crop box on the host, then run the
    fused crop+resize Pallas kernel on TPU."""
    rng = rng if rng is not None else random.Random()
    i, j, h, w = get_params(img.shape, scale, ratio, rng)
    return resized_crop(img, i, j, h, w, size)


if __name__ == "__main__":
    key = jax.random.PRNGKey(0)
    C, H, W = 4, 24, 20          # small CHW image, as the module's forward expects
    size = 16
    scale, ratio = (0.8, 1.0), (3.0 / 4.0, 4.0 / 3.0)

    img = jax.random.uniform(key, (C, H, W), dtype=jnp.float32)

    # Forward pass (deterministic host RNG for the crop box).
    out = random_resized_crop(img, size, scale, ratio, rng=random.Random(0))
    out = jax.block_until_ready(out)

    # Reference: same crop box (same seed), exact f32 bilinear math on the host.
    i, j, h, w = get_params((C, H, W), scale, ratio, random.Random(0))
    m_h = _crop_resize_matrix(size, h, i, H)
    m_w = _crop_resize_matrix(size, w, j, W)
    ref = np.einsum("oh,chw,pw->cop", m_h, np.asarray(img, np.float32), m_w)

    assert out.shape == (C, size, size), out.shape
    assert np.allclose(np.asarray(out, np.float32), ref, atol=2e-2, rtol=2e-2), \
        "mismatch vs reference"
    print("KERNEL_OK")
</pallas_src>

<mosaic_0001>
module attributes {stable_mosaic.version = 11 : i64} {
  func.func @_crop_resize_kernel(%arg0: i32, %arg1: memref<16x24xbf16, #tpu.memory_space<vmem>>, %arg2: memref<20x16xbf16, #tpu.memory_space<vmem>>, %arg3: memref<4x24x20xf32, #tpu.memory_space<vmem>>, %arg4: memref<4x16x16xf32, #tpu.memory_space<vmem>>) attributes {dimension_semantics = [#tpu.dimension_semantics<parallel>], iteration_bounds = array<i64: 1>, scalar_prefetch = 0 : i64, scratch_operands = 0 : i64, tpu.core_type = #tpu.core_type<tc>, window_params = [{pipeline_mode = #tpu.pipeline_mode<synchronous>, transform_indices = @transform_0, window_bounds = array<i64: 16, 24>}, {pipeline_mode = #tpu.pipeline_mode<synchronous>, transform_indices = @transform_1, window_bounds = array<i64: 20, 16>}, {transform_indices = @transform_2, window_bounds = array<i64: 4, 24, 20>}, {transform_indices = @transform_3, window_bounds = array<i64: 4, 16, 16>}]} {
    %c0 = arith.constant 0 : index
    %c0_0 = arith.constant 0 : index
    %0 = vector.load %arg1[%c0, %c0_0] : memref<16x24xbf16, #tpu.memory_space<vmem>>, vector<16x24xbf16>
    %c0_1 = arith.constant 0 : index
    %c0_2 = arith.constant 0 : index
    %1 = vector.load %arg2[%c0_1, %c0_2] : memref<20x16xbf16, #tpu.memory_space<vmem>>, vector<20x16xbf16>
    %c0_3 = arith.constant 0 : index
    %c0_4 = arith.constant 0 : index
    %c0_5 = arith.constant 0 : index
    %2 = vector.load %arg3[%c0_3, %c0_4, %c0_5] : memref<4x24x20xf32, #tpu.memory_space<vmem>>, vector<1x24x20xf32>
    %3 = vector.shape_cast %2 : vector<1x24x20xf32> to vector<24x20xf32>
    %4 = arith.truncf %3 : vector<24x20xf32> to vector<24x20xbf16>
    %cst = arith.constant dense<0.000000e+00> : vector<16x20xf32>
    %5 = tpu.matmul %0, %4, %cst {dimension_numbers = #tpu.dot_dimension_numbers<[1], [0], [0], [1], [0, 0, 1, 1], [], []>} : vector<16x24xbf16>, vector<24x20xbf16>, vector<16x20xf32> -> vector<16x20xf32>
    %6 = arith.truncf %5 : vector<16x20xf32> to vector<16x20xbf16>
    %cst_6 = arith.constant dense<0.000000e+00> : vector<16x16xf32>
    %7 = tpu.matmul %6, %1, %cst_6 {dimension_numbers = #tpu.dot_dimension_numbers<[1], [0], [0], [1], [0, 0, 1, 1], [], []>} : vector<16x20xbf16>, vector<20x16xbf16>, vector<16x16xf32> -> vector<16x16xf32>
    %c0_7 = arith.constant 0 : index
    %c0_8 = arith.constant 0 : index
    %c0_9 = arith.constant 0 : index
    %8 = vector.load %arg4[%c0_7, %c0_8, %c0_9] : memref<4x16x16xf32, #tpu.memory_space<vmem>>, vector<1x16x16xf32>
    %9 = vector.shape_cast %8 : vector<1x16x16xf32> to vector<16x16xf32>
    %10 = vector.shape_cast %7 : vector<16x16xf32> to vector<1x16x16xf32>
    tpu.vector_store %arg4[%c0_7, %c0_8, %c0_9], %10 {strides = array<i32>} : memref<4x16x16xf32, #tpu.memory_space<vmem>>, vector<1x16x16xf32>,
    %c1 = arith.constant 1 : index
    %c0_10 = arith.constant 0 : index
    %c0_11 = arith.constant 0 : index
    %11 = vector.load %arg3[%c1, %c0_10, %c0_11] : memref<4x24x20xf32, #tpu.memory_space<vmem>>, vector<1x24x20xf32>
    %12 = vector.shape_cast %11 : vector<1x24x20xf32> to vector<24x20xf32>
    %13 = arith.truncf %12 : vector<24x20xf32> to vector<24x20xbf16>
    %cst_12 = arith.constant dense<0.000000e+00> : vector<16x20xf32>
    %14 = tpu.matmul %0, %13, %cst_12 {dimension_numbers = #tpu.dot_dimension_numbers<[1], [0], [0], [1], [0, 0, 1, 1], [], []>} : vector<16x24xbf16>, vector<24x20xbf16>, vector<16x20xf32> -> vector<16x20xf32>
    %15 = arith.truncf %14 : vector<16x20xf32> to vector<16x20xbf16>
    %cst_13 = arith.constant dense<0.000000e+00> : vector<16x16xf32>
    %16 = tpu.matmul %15, %1, %cst_13 {dimension_numbers = #tpu.dot_dimension_numbers<[1], [0], [0], [1], [0, 0, 1, 1], [], []>} : vector<16x20xbf16>, vector<20x16xbf16>, vector<16x16xf32> -> vector<16x16xf32>
    %c1_14 = arith.constant 1 : index
    %c0_15 = arith.constant 0 : index
    %c0_16 = arith.constant 0 : index
    %17 = vector.load %arg4[%c1_14, %c0_15, %c0_16] : memref<4x16x16xf32, #tpu.memory_space<vmem>>, vector<1x16x16xf32>
    %18 = vector.shape_cast %17 : vector<1x16x16xf32> to vector<16x16xf32>
    %19 = vector.shape_cast %16 : vector<16x16xf32> to vector<1x16x16xf32>
    tpu.vector_store %arg4[%c1_14, %c0_15, %c0_16], %19 {strides = array<i32>} : memref<4x16x16xf32, #tpu.memory_space<vmem>>, vector<1x16x16xf32>,
    %c2 = arith.constant 2 : index
    %c0_17 = arith.constant 0 : index
    %c0_18 = arith.constant 0 : index
    %20 = vector.load %arg3[%c2, %c0_17, %c0_18] : memref<4x24x20xf32, #tpu.memory_space<vmem>>, vector<1x24x20xf32>
    %21 = vector.shape_cast %20 : vector<1x24x20xf32> to vector<24x20xf32>
    %22 = arith.truncf %21 : vector<24x20xf32> to vector<24x20xbf16>
    %cst_19 = arith.constant dense<0.000000e+00> : vector<16x20xf32>
    %23 = tpu.matmul %0, %22, %cst_19 {dimension_numbers = #tpu.dot_dimension_numbers<[1], [0], [0], [1], [0, 0, 1, 1], [], []>} : vector<16x24xbf16>, vector<24x20xbf16>, vector<16x20xf32> -> vector<16x20xf32>
    %24 = arith.truncf %23 : vector<16x20xf32> to vector<16x20xbf16>
    %cst_20 = arith.constant dense<0.000000e+00> : vector<16x16xf32>
    %25 = tpu.matmul %24, %1, %cst_20 {dimension_numbers = #tpu.dot_dimension_numbers<[1], [0], [0], [1], [0, 0, 1, 1], [], []>} : vector<16x20xbf16>, vector<20x16xbf16>, vector<16x16xf32> -> vector<16x16xf32>
    %c2_21 = arith.constant 2 : index
    %c0_22 = arith.constant 0 : index
    %c0_23 = arith.constant 0 : index
    %26 = vector.load %arg4[%c2_21, %c0_22, %c0_23] : memref<4x16x16xf32, #tpu.memory_space<vmem>>, vector<1x16x16xf32>
    %27 = vector.shape_cast %26 : vector<1x16x16xf32> to vector<16x16xf32>
    %28 = vector.shape_cast %25 : vector<16x16xf32> to vector<1x16x16xf32>
    tpu.vector_store %arg4[%c2_21, %c0_22, %c0_23], %28 {strides = array<i32>} : memref<4x16x16xf32, #tpu.memory_space<vmem>>, vector<1x16x16xf32>,
    %c3 = arith.constant 3 : index
    %c0_24 = arith.constant 0 : index
    %c0_25 = arith.constant 0 : index
    %29 = vector.load %arg3[%c3, %c0_24, %c0_25] : memref<4x24x20xf32, #tpu.memory_space<vmem>>, vector<1x24x20xf32>
    %30 = vector.shape_cast %29 : vector<1x24x20xf32> to vector<24x20xf32>
    %31 = arith.truncf %30 : vector<24x20xf32> to vector<24x20xbf16>
    %cst_26 = arith.constant dense<0.000000e+00> : vector<16x20xf32>
    %32 = tpu.matmul %0, %31, %cst_26 {dimension_numbers = #tpu.dot_dimension_numbers<[1], [0], [0], [1], [0, 0, 1, 1], [], []>} : vector<16x24xbf16>, vector<24x20xbf16>, vector<16x20xf32> -> vector<16x20xf32>
    %33 = arith.truncf %32 : vector<16x20xf32> to vector<16x20xbf16>
    %cst_27 = arith.constant dense<0.000000e+00> : vector<16x16xf32>
    %34 = tpu.matmul %33, %1, %cst_27 {dimension_numbers = #tpu.dot_dimension_numbers<[1], [0], [0], [1], [0, 0, 1, 1], [], []>} : vector<16x20xbf16>, vector<20x16xbf16>, vector<16x16xf32> -> vector<16x16xf32>
    %c3_28 = arith.constant 3 : index
    %c0_29 = arith.constant 0 : index
    %c0_30 = arith.constant 0 : index
    %35 = vector.load %arg4[%c3_28, %c0_29, %c0_30] : memref<4x16x16xf32, #tpu.memory_space<vmem>>, vector<1x16x16xf32>
    %36 = vector.shape_cast %35 : vector<1x16x16xf32> to vector<16x16xf32>
    %37 = vector.shape_cast %34 : vector<16x16xf32> to vector<1x16x16xf32>
    tpu.vector_store %arg4[%c3_28, %c0_29, %c0_30], %37 {strides = array<i32>} : memref<4x16x16xf32, #tpu.memory_space<vmem>>, vector<1x16x16xf32>,
    return
  }
  func.func @transform_0(%arg0: i32) -> (i32, i32) {
    %c0_i32 = arith.constant 0 : i32
    %c0_i32_0 = arith.constant 0 : i32
    %c0_i32_1 = arith.constant 0 : i32
    return %c0_i32, %c0_i32_0 : i32, i32
  }
  func.func @transform_1(%arg0: i32) -> (i32, i32) {
    %c0_i32 = arith.constant 0 : i32
    %c0_i32_0 = arith.constant 0 : i32
    %c0_i32_1 = arith.constant 0 : i32
    return %c0_i32, %c0_i32_0 : i32, i32
  }
  func.func @transform_2(%arg0: i32) -> (i32, i32, i32) {
    %c0_i32 = arith.constant 0 : i32
    %c0_i32_0 = arith.constant 0 : i32
    %c0_i32_1 = arith.constant 0 : i32
    return %arg0, %c0_i32, %c0_i32_0 : i32, i32, i32
  }
  func.func @transform_3(%arg0: i32) -> (i32, i32, i32) {
    %c0_i32 = arith.constant 0 : i32
    %c0_i32_0 = arith.constant 0 : i32
    %c0_i32_1 = arith.constant 0 : i32
    return %arg0, %c0_i32, %c0_i32_0 : i32, i32, i32
  }
}

</mosaic_0001>

<llo_original>
// kernel: tpu_custom_call.1
$region0: #{tpu_custom_call.1}
  #allocation0 [shape = 'u32[]', space=smem, size = 0x4, offset = 0x4, fixed_abs, tag = 'smem constant byte address 0x4 - core index']
  #allocation1 [shape = 'u32[72,128]{1,0:T(1,128)}', space=vmem, size = 0x9000, scoped, tag = 'internal scratch']
  %s0 = inlined_call_operand.vmem [shape: bf16[16,24], index: 0, kind: input, shape index: {}]
  %s1 = inlined_call_operand.vmem [shape: bf16[20,16], index: 1, kind: input, shape index: {}]
  %s2 = inlined_call_operand.vmem [shape: f32[4,24,20], index: 2, kind: input, shape index: {}]
  %s3 = inlined_call_operand.hbm [shape: f32[4,16,16], index: 3, kind: output, shape index: {}]
  %s4 = sld [smem:[#allocation0]]
  $region22: #{tpu_custom_call.1} parent=0
    _
  %s6 = ssub.s32 1, %s4
  %s7 = scalar_select 0, %s6, %s4
  $region1: #{tpu_custom_call.1} parent=0
    #allocation2 [shape = 'u8[32768]{0}', space=vmem, size = 0x8000, scoped, tag = 'output window, operand 0, single buffered']
    #allocation3 [shape = 's32[1]{0}', space=sflag, size = 0x4, scoped, tag = 'scoped memory for tpu_custom_call.1']
    %8 = vsyncpa [#allocation3], 0
    // Predicated region
    $region2: #{tpu_custom_call.1} parent=1 // pred_check
      _
    $region3: #{tpu_custom_call.1} parent=1 // pred_check_branch
      %10 = sbr.rel (0) target = $region5
    $region4: #{tpu_custom_call.1} parent=1 // pred_region
      _
    $region5: #{tpu_custom_call.1} parent=1 // pred_fallthru
      _
    // Predicated region
    $region6: #{tpu_custom_call.1} parent=1 // pred_check
      _
    $region7: #{tpu_custom_call.1} parent=1 // pred_check_branch
      %12 = sbr.rel (0) target = $region9
    $region8: #{tpu_custom_call.1} parent=1 // pred_region
      _
    $region9: #{tpu_custom_call.1} parent=1 // pred_fallthru
      _
    // Predicated region
    $region10: #{tpu_custom_call.1} parent=1 // pred_check
      _
    $region11: #{tpu_custom_call.1} parent=1 // pred_check_branch
      %14 = sbr.rel (0) target = $region13
    $region12: #{tpu_custom_call.1} parent=1 // pred_region
      _
    $region13: #{tpu_custom_call.1} parent=1 // pred_fallthru
      _
    %v16 = vld [vmem:[%s0] sm:$0xf]
    %v17 = vld [vmem:[%s0 + $0x4] sm:$0xf]
    %v18 = vld [vmem:[%s1] sm:$0xf]
    %v19 = vld [vmem:[%s1 + $0x4] sm:$0xf]
    %v20 = vld [vmem:[%s1 + $0x8] sm:$0x3]
    %v21 = vld [vmem:[%s2] sm:$0xff]
    %v22 = vld [vmem:[%s2 + $0x8] sm:$0xff]
    %v23 = vld [vmem:[%s2 + $0x10] sm:$0xff]
    %v24 = vpack.c.bf16 %v22, %v21
    %v25 = vpack.c.bf16 %v23, %v23
    %v28 = vunpack.c.l.b16 %v16
    %v29 = vunpack.c.l.b16 %v17
    %v30 = vpack.c.b16 %v29, %v28
    %vm31 = vcmask 195584
    %v33 = vsel %vm31, %v30, 0
    %vm35 = vcmask 1043456
    %v37 = vsel %vm35, %v25, 0
    %39 = vmatpush.bf16.msra.mxu0 0
    %40 = vmatpush.bf16.msra.mxu0 0
    %41 = vmatpush.bf16.msra.mxu0 0
    %42 = vmatpush.bf16.msra.mxu0 0
    %43 = vmatpush.bf16.msra.mxu0 0
    %44 = vmatpush.bf16.msra.mxu0 0
    %45 = vmatpush.bf16.msra.mxu0 %v37
    %46 = vmatpush.bf16.msra.mxu0 %v24
    %47 = vmatmul.bf16.gmra.mxu0 %v33
    %v48 = vpop.f32.mrf.mxu0
    %v49 = vadd.f32 0.0, %v48
    %v50 = vpop.f32.mrf.mxu0
    %v51 = vadd.f32 0.0, %v50
    %52 = vdwg.mxu0
    %v53 = vpack.c.bf16 %v51, %v49
    %v57 = vunpack.c.l.b16 %v18
    %v58 = vunpack.c.l.b16 %v19
    %v59 = vunpack.c.l.b16 %v20
    %v60 = vpack.c.b16 %v58, %v57
    %v61 = vpack.c.b16 %v59, %v59
    %vm63 = vcmask 162816
    %v65 = vsel %vm63, %v53, 0
    %vm67 = vcmask 1041408
    %v69 = vsel %vm67, %v61, 0
    %71 = vmatpush.bf16.msra.mxu0 0
    %72 = vmatpush.bf16.msra.mxu0 0
    %73 = vmatpush.bf16.msra.mxu0 0
    %74 = vmatpush.bf16.msra.mxu0 0
    %75 = vmatpush.bf16.msra.mxu0 0
    %76 = vmatpush.bf16.msra.mxu0 0
    %77 = vmatpush.bf16.msra.mxu0 %v69
    %78 = vmatpush.bf16.msra.mxu0 %v60
    %79 = vmatmul.bf16.gmra.mxu0 %v65
    %v80 = vpop.f32.mrf.mxu0
    %v81 = vadd.f32 0.0, %v80
    %v82 = vpop.f32.mrf.mxu0
    %v83 = vadd.f32 0.0, %v82
    %84 = vdwg.mxu0
    %vm85 = vcmask 130048
    %86 = vst.msk [vmem:[#allocation2] sm:$0xff] %vm85, %v81
    %87 = vst.msk [vmem:[#allocation2 + $0x8] sm:$0xff] %vm85, %v83
    %s88 = scalar_lea.vmem %s2, 24
    %v89 = vld [vmem:[%s88] sm:$0xff]
    %v90 = vld [vmem:[%s88 + $0x8] sm:$0xff]
    %v91 = vld [vmem:[%s88 + $0x10] sm:$0xff]
    %v92 = vpack.c.bf16 %v90, %v89
    %v93 = vpack.c.bf16 %v91, %v91
    %v95 = vsel %vm35, %v93, 0
    %97 = vmatpush.bf16.msra.mxu0 0
    %98 = vmatpush.bf16.msra.mxu0 0
    %99 = vmatpush.bf16.msra.mxu0 0
    %100 = vmatpush.bf16.msra.mxu0 0
    %101 = vmatpush.bf16.msra.mxu0 0
    %102 = vmatpush.bf16.msra.mxu0 0
    %103 = vmatpush.bf16.msra.mxu0 %v95
    %104 = vmatpush.bf16.msra.mxu0 %v92
    %105 = vmatmul.bf16.gmra.mxu0 %v33
    %v106 = vpop.f32.mrf.mxu0
    %v107 = vadd.f32 0.0, %v106
    %v108 = vpop.f32.mrf.mxu0
    %v109 = vadd.f32 0.0, %v108
    %110 = vdwg.mxu0
    %v111 = vpack.c.bf16 %v109, %v107
    %v113 = vsel %vm63, %v111, 0
    %115 = vmatpush.bf16.msra.mxu0 0
    %116 = vmatpush.bf16.msra.mxu0 0
    %117 = vmatpush.bf16.msra.mxu0 0
    %118 = vmatpush.bf16.msra.mxu0 0
    %119 = vmatpush.bf16.msra.mxu0 0
    %120 = vmatpush.bf16.msra.mxu0 0
    %121 = vmatpush.bf16.msra.mxu0 %v69
    %122 = vmatpush.bf16.msra.mxu0 %v60
    %123 = vmatmul.bf16.gmra.mxu0 %v113
    %v124 = vpop.f32.mrf.mxu0
    %v125 = vadd.f32 0.0, %v124
    %v126 = vpop.f32.mrf.mxu0
    %v127 = vadd.f32 0.0, %v126
    %128 = vdwg.mxu0
    %s129 = scalar_lea.vmem [#allocation2], 16
    %130 = vst.msk [vmem:[%s129] sm:$0xff] %vm85, %v125
    %131 = vst.msk [vmem:[%s129 + $0x8] sm:$0xff] %vm85, %v127
    %s132 = scalar_lea.vmem %s2, 48
    %v133 = vld [vmem:[%s132] sm:$0xff]
    %v134 = vld [vmem:[%s132 + $0x8] sm:$0xff]
    %v135 = vld [vmem:[%s132 + $0x10] sm:$0xff]
    %v136 = vpack.c.bf16 %v134, %v133
    %v137 = vpack.c.bf16 %v135, %v135
    %v139 = vsel %vm35, %v137, 0
    %141 = vmatpush.bf16.msra.mxu0 0
    %142 = vmatpush.bf16.msra.mxu0 0
    %143 = vmatpush.bf16.msra.mxu0 0
    %144 = vmatpush.bf16.msra.mxu0 0
    %145 = vmatpush.bf16.msra.mxu0 0
    %146 = vmatpush.bf16.msra.mxu0 0
    %147 = vmatpush.bf16.msra.mxu0 %v139
    %148 = vmatpush.bf16.msra.mxu0 %v136
    %149 = vmatmul.bf16.gmra.mxu0 %v33
    %v150 = vpop.f32.mrf.mxu0
    %v151 = vadd.f32 0.0, %v150
    %v152 = vpop.f32.mrf.mxu0
    %v153 = vadd.f32 0.0, %v152
    %154 = vdwg.mxu0
    %v155 = vpack.c.bf16 %v153, %v151
    %v157 = vsel %vm63, %v155, 0
    %159 = vmatpush.bf16.msra.mxu0 0
    %160 = vmatpush.bf16.msra.mxu0 0
    %161 = vmatpush.bf16.msra.mxu0 0
    %162 = vmatpush.bf16.msra.mxu0 0
    %163 = vmatpush.bf16.msra.mxu0 0
    %164 = vmatpush.bf16.msra.mxu0 0
    %165 = vmatpush.bf16.msra.mxu0 %v69
    %166 = vmatpush.bf16.msra.mxu0 %v60
    %167 = vmatmul.bf16.gmra.mxu0 %v157
    %v168 = vpop.f32.mrf.mxu0
    %v169 = vadd.f32 0.0, %v168
    %v170 = vpop.f32.mrf.mxu0
    %v171 = vadd.f32 0.0, %v170
    %172 = vdwg.mxu0
    %s173 = scalar_lea.vmem [#allocation2], 32
    %174 = vst.msk [vmem:[%s173] sm:$0xff] %vm85, %v169
    %175 = vst.msk [vmem:[%s173 + $0x8] sm:$0xff] %vm85, %v171
    %s176 = scalar_lea.vmem %s2, 72
    %v177 = vld [vmem:[%s176] sm:$0xff]
    %v178 = vld [vmem:[%s176 + $0x8] sm:$0xff]
    %v179 = vld [vmem:[%s176 + $0x10] sm:$0xff]
    %v180 = vpack.c.bf16 %v178, %v177
    %v181 = vpack.c.bf16 %v179, %v179
    %v183 = vsel %vm35, %v181, 0
    %185 = vmatpush.bf16.msra.mxu0 0
    %186 = vmatpush.bf16.msra.mxu0 0
    %187 = vmatpush.bf16.msra.mxu0 0
    %188 = vmatpush.bf16.msra.mxu0 0
    %189 = vmatpush.bf16.msra.mxu0 0
    %190 = vmatpush.bf16.msra.mxu0 0
    %191 = vmatpush.bf16.msra.mxu0 %v183
    %192 = vmatpush.bf16.msra.mxu0 %v180
    %193 = vmatmul.bf16.gmra.mxu0 %v33
    %v194 = vpop.f32.mrf.mxu0
    %v195 = vadd.f32 0.0, %v194
    %v196 = vpop.f32.mrf.mxu0
    %v197 = vadd.f32 0.0, %v196
    %198 = vdwg.mxu0
    %v199 = vpack.c.bf16 %v197, %v195
    %v201 = vsel %vm63, %v199, 0
    %203 = vmatpush.bf16.msra.mxu0 0
    %204 = vmatpush.bf16.msra.mxu0 0
    %205 = vmatpush.bf16.msra.mxu0 0
    %206 = vmatpush.bf16.msra.mxu0 0
    %207 = vmatpush.bf16.msra.mxu0 0
    %208 = vmatpush.bf16.msra.mxu0 0
    %209 = vmatpush.bf16.msra.mxu0 %v69
    %210 = vmatpush.bf16.msra.mxu0 %v60
    %211 = vmatmul.bf16.gmra.mxu0 %v201
    %v212 = vpop.f32.mrf.mxu0
    %v213 = vadd.f32 0.0, %v212
    %v214 = vpop.f32.mrf.mxu0
    %v215 = vadd.f32 0.0, %v214
    %216 = vdwg.mxu0
    %s217 = scalar_lea.vmem [#allocation2], 48
    %218 = vst.msk [vmem:[%s217] sm:$0xff] %vm85, %v213
    %219 = vst.msk [vmem:[%s217 + $0x8] sm:$0xff] %vm85, %v215
    // Predicated region
    $region14: #{tpu_custom_call.1} parent=1 // pred_check
      _
    $region15: #{tpu_custom_call.1} parent=1 // pred_check_branch
      %221 = sbr.rel (0) target = $region17
    $region16: #{tpu_custom_call.1} parent=1 // pred_region
      %223 = vsyncadd [#allocation3], 0
      %s224 = sshll.u32 [#allocation2], 4
      %s225 = int_to_ptr.vmem [resolvable:$true] %s224
      %s226 = sshll.u32 %s3, 4
      %s227 = int_to_ptr.hbm [resolvable:$true] %s226
      %232 = dma.vmem_to_hbm [thread:$0]  %s225, 1024, %s227, [#allocation3], 128, 128, 8
    $region17: #{tpu_custom_call.1} parent=1 // pred_fallthru
      _
    // Predicated region
    $region18: #{tpu_custom_call.1} parent=1 // pred_check
      _
    $region19: #{tpu_custom_call.1} parent=1 // pred_check_branch
      %234 = sbr.rel (0) target = $region21
    $region20: #{tpu_custom_call.1} parent=1 // pred_region
      %236 = dma.done [#allocation3], 1024
    $region21: #{tpu_custom_call.1} parent=1 // pred_fallthru
      _
    %237 = vsyncpa [#allocation3], 1

</llo_original>
